<compile_context>
chip_gen: v6e
topology: v6e:2x2x1
jax: 0.10.0
libtpu: 0.0.40
codegen_flags: <defaults>
</compile_context>

<pallas_src>
import jax
import jax.numpy as jnp
from jax.experimental import pallas as pl
from jax.experimental.pallas import tpu as pltpu


def _round_up(a: int, b: int) -> int:
    return ((a + b - 1) // b) * b


def _edgeconv_kernel(e_ref, w_ref, b_ref, o_ref):
    # e_ref: (TM, (k+1)*C)       gathered [self, nbr_1..nbr_k] rows, flattened
    # w_ref: ((k+1)*C, C_out_p)  stacked folded weights (BN scale folded in)
    # b_ref: (1, C_out_p)        folded bias (conv bias + BN shift), f32
    # o_ref: (TM, C_out_p)
    y = jnp.dot(e_ref[...], w_ref[...], preferred_element_type=jnp.float32)
    y = y + b_ref[...]
    y = jnp.where(y > 0, y, 0.2 * y)            # LeakyReLU(0.2)
    o_ref[...] = y.astype(o_ref.dtype)


def _knn_indices(feat, k):
    """feat: (B, C, N) -> idx: (B, N, k), nearest neighbours excluding self (top_k)."""
    # TODO(synk): top_k / sort has no Pallas TPU (Mosaic) lowering; kept in XLA.
    ft = jnp.swapaxes(feat, 1, 2).astype(jnp.float32)               # (B, N, C)
    sq = jnp.sum(ft * ft, axis=-1)                                  # (B, N)
    dist = (-2.0) * jnp.einsum("bnc,bmc->bnm", ft, ft) \
        + sq[:, :, None] + sq[:, None, :]                           # (B, N, N)
    n = ft.shape[1]
    dist = jnp.where(jnp.eye(n, dtype=bool)[None], jnp.inf, dist)   # mask self explicitly
    _, idx = jax.lax.top_k(-dist, k)                                # (B, N, k)
    return idx


def _vmem_limit_bytes():
    cap = 128 * 1024 * 1024
    try:
        cap = int(pltpu.get_tpu_info().vmem_capacity_bytes)         # 64 MiB on v7x, 128 on v5e/v6e
    except Exception:
        pass
    return min(96 * 1024 * 1024, max(32 * 1024 * 1024, int(cap * 0.55)))


def edgeconv_forward(x, w_conv, b_conv, gamma, beta, run_mean, run_var,
                     *, num_k, eps=1e-5, pc=None, block_m=None, stream_dtype=None):
    """EdgeConv forward.

    x:       (B, C_in, N) point features
    w_conv:  (C_out, 2*C_in, 1, num_k)   (PyTorch Conv2d layout)
    b_conv, gamma, beta, run_mean, run_var: (C_out,)
    Returns: (B, C_out, N).  BatchNorm applied in inference mode.
    """
    B, C, N = x.shape
    C_out = w_conv.shape[0]
    k = num_k
    M = B * N
    K_full = (k + 1) * C
    C_out_pad = _round_up(C_out, 128)                               # lane-dense output
    out_dtype = x.dtype
    if stream_dtype is None:
        stream_dtype = jnp.bfloat16 if x.dtype == jnp.float32 else x.dtype

    # ---- tile size from the per-generation VMEM budget -------------------------
    vmem_limit = _vmem_limit_bytes()
    stream_bytes = jnp.dtype(stream_dtype).itemsize
    out_bytes = jnp.dtype(out_dtype).itemsize
    if block_m is None:
        weight_bytes = K_full * C_out_pad * stream_bytes + C_out_pad * 4
        row_bytes = K_full * stream_bytes + C_out_pad * out_bytes
        avail = vmem_limit - 3 * weight_bytes
        tm = max(8, avail // (2 * row_bytes))                       # double-buffered stream
        tm = min(tm, 2048)
    else:
        tm = block_m
    tm = max(8, (int(tm) // 8) * 8)
    if M >= 16:                                                      # keep >=2 grid steps (v7x megacore)
        tm = min(tm, _round_up(-(-M // 2), 8))
    tm = max(8, tm)
    for t in range(tm, max(7, tm - 128), -8):                        # prefer tile dividing M (no pad rows)
        if t >= 8 and M % t == 0:
            tm = t
            break
    M_pad = _round_up(M, tm)

    # ---- graph construction + fused (self + neighbours) gather (XLA) -----------
    idx = _knn_indices(x if pc is None else pc, k)                   # (B, N, k)
    xt_flat = jnp.swapaxes(x, 1, 2).reshape(M, C).astype(stream_dtype)
    base = (jnp.arange(B, dtype=jnp.int32) * N)[:, None, None]       # (B,1,1)
    self_flat = jnp.broadcast_to(
        jnp.arange(N, dtype=jnp.int32)[None, :, None] + base, (B, N, 1))
    nbr_flat = idx.astype(jnp.int32) + base                          # (B, N, k)
    gidx = jnp.concatenate([self_flat, nbr_flat], axis=-1).reshape(M, k + 1)
    if M_pad != M:
        gidx = jnp.pad(gidx, ((0, M_pad - M), (0, 0)))               # pad tiny index, not the slab
    # TODO(synk): for large C (row >= ~512 B) this gather should move into the kernel
    # (scalar-prefetched indices + double-buffered make_async_copy) to avoid the HBM
    # round-trip of the (M, (k+1)*C) slab; kept in XLA for small C.
    edge = jnp.take(xt_flat, gidx, axis=0).reshape(M_pad, K_full)    # (M_pad, (k+1)*C)

    # ---- fold BN (inference) + conv bias, factorise + stack the [1, k] conv ----
    s = gamma.astype(jnp.float32) / jnp.sqrt(run_var.astype(jnp.float32) + eps)
    bias_eff = (b_conv - run_mean) * s + beta                        # (C_out,)
    w = w_conv[:, :, 0, :].astype(jnp.float32)                       # (C_out, 2C, k)
    # edge_feat = concat([x_i, x_j - x_i]); the constant x_i collapses over k:
    #   out = x_i @ w_cent + flatten_k(x_j) @ w_nbr
    w_cent = (w[:, :C, :].sum(-1) - w[:, C:, :].sum(-1)).T           # (C, C_out)
    w_nbr = jnp.transpose(w[:, C:, :], (2, 1, 0)).reshape(k * C, C_out)   # rows = (kk, c)
    w_full = jnp.concatenate([w_cent, w_nbr], axis=0) * s[None, :]   # ((k+1)*C, C_out), f32 fold
    w_full = w_full.astype(stream_dtype)
    bias2 = bias_eff.reshape(1, C_out).astype(jnp.float32)
    if C_out_pad != C_out:
        w_full = jnp.pad(w_full, ((0, 0), (0, C_out_pad - C_out)))
        bias2 = jnp.pad(bias2, ((0, 0), (0, C_out_pad - C_out)))

    # ---- single fused matmul + bias + LeakyReLU kernel --------------------------
    out2 = pl.pallas_call(
        _edgeconv_kernel,
        out_shape=jax.ShapeDtypeStruct((M_pad, C_out_pad), out_dtype),
        grid_spec=pltpu.PrefetchScalarGridSpec(
            num_scalar_prefetch=0,
            grid=(M_pad // tm,),
            in_specs=[
                pl.BlockSpec((tm, K_full), lambda i: (i, 0)),
                pl.BlockSpec((K_full, C_out_pad), lambda i: (0, 0)),
                pl.BlockSpec((1, C_out_pad), lambda i: (0, 0)),
            ],
            out_specs=pl.BlockSpec((tm, C_out_pad), lambda i: (i, 0)),
        ),
        compiler_params=pltpu.CompilerParams(
            dimension_semantics=("parallel",),
            vmem_limit_bytes=vmem_limit,
        ),
    )(edge, w_full, bias2)

    out = out2[:M, :C_out].reshape(B, N, C_out)
    return jnp.swapaxes(out, 1, 2)                                   # (B, C_out, N)


def _reference(x, w_conv, b_conv, gamma, beta, run_mean, run_var,
               *, num_k, eps=1e-5, pc=None):
    """Straightforward JAX mirror of the PyTorch module (builds the full edge tensor)."""
    B, C, N = x.shape
    idx = _knn_indices(x if pc is None else pc, num_k)               # (B, N, k)
    xt = jnp.swapaxes(x, 1, 2)                                       # (B, N, C)
    nbr = jax.vmap(lambda xb, ib: xb[ib])(xt, idx)                   # (B, N, k, C)
    central = jnp.broadcast_to(xt[:, :, None, :], nbr.shape)
    edge = jnp.concatenate([central, nbr - central], axis=-1)        # (B, N, k, 2C)
    w = w_conv[:, :, 0, :]                                           # (C_out, 2C, k)
    y = jnp.einsum("bnkc,ock->bno", edge, w) + b_conv                # (B, N, C_out)
    y = (y - run_mean) / jnp.sqrt(run_var + eps) * gamma + beta      # inference BN
    y = jnp.where(y > 0, y, 0.2 * y)                                 # LeakyReLU(0.2)
    return jnp.swapaxes(y, 1, 2)                                     # (B, C_out, N)


if __name__ == "__main__":
    # Small shapes consistent with the module: point cloud (B, C_in, N) with kNN.
    B, C_in, N = 2, 4, 64
    C_out, num_k = 32, 8

    key = jax.random.PRNGKey(0)
    kx, kw, kb, kg, kbe, km, kv = jax.random.split(key, 7)

    x = jax.random.normal(kx, (B, C_in, N), dtype=jnp.float32)

    fan_in = 2 * C_in * num_k
    bound = 1.0 / (fan_in ** 0.5)
    w_conv = jax.random.uniform(kw, (C_out, 2 * C_in, 1, num_k),
                                minval=-bound, maxval=bound, dtype=jnp.float32)
    b_conv = jax.random.uniform(kb, (C_out,), minval=-bound, maxval=bound,
                                dtype=jnp.float32)
    gamma = jax.random.uniform(kg, (C_out,), minval=0.5, maxval=1.5, dtype=jnp.float32)
    beta = 0.1 * jax.random.normal(kbe, (C_out,), dtype=jnp.float32)
    run_mean = 0.1 * jax.random.normal(km, (C_out,), dtype=jnp.float32)
    run_var = jax.random.uniform(kv, (C_out,), minval=0.5, maxval=1.5, dtype=jnp.float32)

    ref = _reference(x, w_conv, b_conv, gamma, beta, run_mean, run_var, num_k=num_k)

    # 1) exact-math check (f32 streaming): validates conv factorisation + BN fold.
    out_f32 = edgeconv_forward(x, w_conv, b_conv, gamma, beta, run_mean, run_var,
                               num_k=num_k, stream_dtype=jnp.float32)
    out_f32 = jax.block_until_ready(out_f32)
    if out_f32.shape != (B, C_out, N):
        raise AssertionError(f"bad output shape {out_f32.shape}")
    if not jnp.allclose(out_f32, ref, atol=1e-4, rtol=1e-4):
        err = float(jnp.max(jnp.abs(out_f32 - ref)))
        raise AssertionError(f"f32 Pallas EdgeConv mismatch vs reference (max abs err {err})")

    # 2) default path (bf16-streamed dominant operand, f32 accumulation/epilogue).
    out = edgeconv_forward(x, w_conv, b_conv, gamma, beta, run_mean, run_var, num_k=num_k)
    out = jax.block_until_ready(out)
    if out.shape != (B, C_out, N):
        raise AssertionError(f"bad output shape {out.shape}")
    if not jnp.allclose(out.astype(jnp.float32), ref, atol=3e-2, rtol=3e-2):
        err = float(jnp.max(jnp.abs(out.astype(jnp.float32) - ref)))
        raise AssertionError(f"bf16 Pallas EdgeConv mismatch vs reference (max abs err {err})")

    print("KERNEL_OK")
</pallas_src>

<mosaic_0001>
module attributes {stable_mosaic.version = 11 : i64} {
  func.func @_edgeconv_kernel(%arg0: i32, %arg1: memref<64x36xf32, #tpu.memory_space<vmem>>, %arg2: memref<36x128xf32, #tpu.memory_space<vmem>>, %arg3: memref<1x128xf32, #tpu.memory_space<vmem>>, %arg4: memref<64x128xf32, #tpu.memory_space<vmem>>) attributes {dimension_semantics = [#tpu.dimension_semantics<parallel>], iteration_bounds = array<i64: 2>, scalar_prefetch = 0 : i64, scratch_operands = 0 : i64, tpu.core_type = #tpu.core_type<tc>, window_params = [{transform_indices = @transform_0, window_bounds = array<i64: 64, 36>}, {pipeline_mode = #tpu.pipeline_mode<synchronous>, transform_indices = @transform_1, window_bounds = array<i64: 36, 128>}, {pipeline_mode = #tpu.pipeline_mode<synchronous>, transform_indices = @transform_2, window_bounds = array<i64: 1, 128>}, {transform_indices = @transform_3, window_bounds = array<i64: 64, 128>}]} {
    %c0 = arith.constant 0 : index
    %c0_0 = arith.constant 0 : index
    %0 = vector.load %arg1[%c0, %c0_0] : memref<64x36xf32, #tpu.memory_space<vmem>>, vector<64x36xf32>
    %c0_1 = arith.constant 0 : index
    %c0_2 = arith.constant 0 : index
    %1 = vector.load %arg2[%c0_1, %c0_2] : memref<36x128xf32, #tpu.memory_space<vmem>>, vector<36x128xf32>
    %cst = arith.constant dense<0.000000e+00> : vector<64x128xf32>
    %2 = tpu.matmul %0, %1, %cst {dimension_numbers = #tpu.dot_dimension_numbers<[1], [0], [0], [1], [0, 0, 1, 1], [], []>} : vector<64x36xf32>, vector<36x128xf32>, vector<64x128xf32> -> vector<64x128xf32>
    %c0_3 = arith.constant 0 : index
    %c0_4 = arith.constant 0 : index
    %3 = vector.load %arg3[%c0_3, %c0_4] : memref<1x128xf32, #tpu.memory_space<vmem>>, vector<1x128xf32>
    %4 = vector.broadcast %3 : vector<1x128xf32> to vector<64x128xf32>
    %5 = arith.addf %2, %4 : vector<64x128xf32>
    %cst_5 = arith.constant 0.000000e+00 : f32
    %6 = vector.broadcast %cst_5 : f32 to vector<64x128xf32>
    %7 = arith.cmpf ogt, %5, %6 : vector<64x128xf32>
    %cst_6 = arith.constant 2.000000e-01 : f32
    %8 = vector.broadcast %cst_6 : f32 to vector<64x128xf32>
    %9 = arith.mulf %8, %5 : vector<64x128xf32>
    %10 = arith.select %7, %5, %9 : vector<64x128xi1>, vector<64x128xf32>
    %c0_7 = arith.constant 0 : index
    %c0_8 = arith.constant 0 : index
    %11 = vector.load %arg4[%c0_7, %c0_8] : memref<64x128xf32, #tpu.memory_space<vmem>>, vector<64x128xf32>
    tpu.vector_store %arg4[%c0_7, %c0_8], %10 {strides = array<i32>} : memref<64x128xf32, #tpu.memory_space<vmem>>, vector<64x128xf32>,
    return
  }
  func.func @transform_0(%arg0: i32) -> (i32, i32) {
    %c0_i32 = arith.constant 0 : i32
    %c0_i32_0 = arith.constant 0 : i32
    return %arg0, %c0_i32 : i32, i32
  }
  func.func @transform_1(%arg0: i32) -> (i32, i32) {
    %c0_i32 = arith.constant 0 : i32
    %c0_i32_0 = arith.constant 0 : i32
    %c0_i32_1 = arith.constant 0 : i32
    return %c0_i32, %c0_i32_0 : i32, i32
  }
  func.func @transform_2(%arg0: i32) -> (i32, i32) {
    %c0_i32 = arith.constant 0 : i32
    %c0_i32_0 = arith.constant 0 : i32
    %c0_i32_1 = arith.constant 0 : i32
    return %c0_i32, %c0_i32_0 : i32, i32
  }
  func.func @transform_3(%arg0: i32) -> (i32, i32) {
    %c0_i32 = arith.constant 0 : i32
    %c0_i32_0 = arith.constant 0 : i32
    return %arg0, %c0_i32 : i32, i32
  }
}

</mosaic_0001>

<llo_original>
// kernel: tpu_custom_call.1
$region0: #{tpu_custom_call.1}
  #allocation0 [shape = 'u32[]', space=smem, size = 0x4, offset = 0x4, fixed_abs, tag = 'smem constant byte address 0x4 - core index']
  #allocation1 [shape = 'u32[144,128]{1,0:T(1,128)}', space=vmem, size = 0x12000, scoped, tag = 'internal scratch']
  %s0 = inlined_call_operand.vmem [shape: f32[128,36], index: 0, kind: input, shape index: {}]
  %s1 = inlined_call_operand.vmem [shape: f32[36,128], index: 1, kind: input, shape index: {}]
  %s2 = inlined_call_operand.vmem [shape: f32[1,128], index: 2, kind: input, shape index: {}]
  %s3 = inlined_call_operand.hbm [shape: f32[128,128], index: 3, kind: output, shape index: {}]
  %s4 = sld [smem:[#allocation0]]
  $region45: #{tpu_custom_call.1} parent=0
    _
  %s6 = ssub.s32 1, %s4
  %s7 = scalar_select 0, %s6, %s4
  $region1: #{tpu_custom_call.1} parent=0
    #allocation2 [shape = 'u8[65536]{0}', space=vmem, size = 0x10000, scoped, tag = 'output window, operand 0']
    #allocation3 [shape = 's32[2]{0}', space=sflag, size = 0x8, scoped, tag = 'scoped memory for tpu_custom_call.1']
    %8 = vsyncpa [#allocation3], 0
    %s9 = scalar_lea.sflag [#allocation3], 1
    %10 = vsyncpa %s9, 0
    loop: start=0, step=1, limit=4
    $region2: #{tpu_custom_call.1} parent=1 // loop_pre_header
      _
    $region3: #{tpu_custom_call.1} parent=1 // loop_header
      %s12 = sphi 0, %s16
      %p13 = scmp.ge.s32.totalorder %s12, 4
      %s22 = sphi 0, %s24
      %s25 = sphi 0, %s22
      %s26 = sphi 0, %s25
      %s42 = sphi 0, %s26
      %s46 = sphi 0, %s46
      %s48 = sphi 0, %s46
      %s49 = sphi 0, %s48
      %s63 = sphi 0, %s49
      %s67 = sphi 0, %s67
      %s69 = sphi 0, %s67
      %s70 = sphi 0, %s69
      %s84 = sphi 0, %s70
      %s90 = sphi 0, %s92
      %s93 = sphi 0, %s90
      %s94 = sphi 0, %s93
      %s110 = sphi 0, %s94
    $region4: #{tpu_custom_call.1} parent=1 // loop_header_branch
      %15 = sbr.rel (%p13) target = $region8
    $region5: #{tpu_custom_call.1} parent=1 // loop_body
      %s17 = ssub.s32 %s12, 1
      %s18 = ssub.s32 %s12, 2
      %s19 = sadd.s32 %s12, 1
      %s20 = ssub.s32 %s12, %s19
      %p21 = scmp.eq.s32.totalorder %s20, 0
      %s23 = sadd.s32 %s22, 1
      %s24 = scalar_select %p21, %s22, %s23
      %p27 = pneg %p21
      %p28 = scmp.eq.s32.totalorder %s12, 1
      %p29 = por %p27, %p28
      %p30 = scmp.ne.s32.totalorder %s22, %s25
      %p31 = scmp.eq.s32.totalorder %s12, 0
      %p32 = por %p30, %p31
      %p33 = scmp.ne.s32.totalorder %s22, %s25
      %p34 = scmp.eq.s32.totalorder %s17, 1
      %p35 = por %p33, %p34
      %p36 = scmp.ne.s32.totalorder %s25, %s26
      %p37 = scmp.eq.s32.totalorder %s17, 0
      %p38 = por %p36, %p37
      %p39 = scmp.ne.s32.totalorder %s25, %s26
      %p40 = scmp.eq.s32.totalorder %s18, 1
      %p41 = por %p39, %p40
      %p43 = scmp.ne.s32.totalorder %s26, %s42
      %p44 = scmp.eq.s32.totalorder %s18, 0
      %p45 = por %p43, %p44
      %s47 = sadd.s32 %s46, 1
      %p50 = scmp.eq.s32.totalorder %s12, 1
      %p51 = scmp.ne.s32.totalorder %s46, %s48
      %p52 = scmp.eq.s32.totalorder %s12, 0
      %p53 = por %p51, %p52
      %p54 = scmp.ne.s32.totalorder %s46, %s48
      %p55 = scmp.eq.s32.totalorder %s17, 1
      %p56 = por %p54, %p55
      %p57 = scmp.ne.s32.totalorder %s48, %s49
      %p58 = scmp.eq.s32.totalorder %s17, 0
      %p59 = por %p57, %p58
      %p60 = scmp.ne.s32.totalorder %s48, %s49
      %p61 = scmp.eq.s32.totalorder %s18, 1
      %p62 = por %p60, %p61
      %p64 = scmp.ne.s32.totalorder %s49, %s63
      %p65 = scmp.eq.s32.totalorder %s18, 0
      %p66 = por %p64, %p65
      %s68 = sadd.s32 %s67, 1
      %p71 = scmp.eq.s32.totalorder %s12, 1
      %p72 = scmp.ne.s32.totalorder %s67, %s69
      %p73 = scmp.eq.s32.totalorder %s12, 0
      %p74 = por %p72, %p73
      %p75 = scmp.ne.s32.totalorder %s67, %s69
      %p76 = scmp.eq.s32.totalorder %s17, 1
      %p77 = por %p75, %p76
      %p78 = scmp.ne.s32.totalorder %s69, %s70
      %p79 = scmp.eq.s32.totalorder %s17, 0
      %p80 = por %p78, %p79
      %p81 = scmp.ne.s32.totalorder %s69, %s70
      %p82 = scmp.eq.s32.totalorder %s18, 1
      %p83 = por %p81, %p82
      %p85 = scmp.ne.s32.totalorder %s70, %s84
      %p86 = scmp.eq.s32.totalorder %s18, 0
      %p87 = por %p85, %p86
      %s88 = ssub.s32 %s12, %s19
      %p89 = scmp.eq.s32.totalorder %s88, 0
      %s91 = sadd.s32 %s90, 1
      %s92 = scalar_select %p89, %s90, %s91
      %p95 = pneg %p89
      %p96 = scmp.eq.s32.totalorder %s12, 1
      %p97 = por %p95, %p96
      %p98 = scmp.ne.s32.totalorder %s90, %s93
      %p99 = scmp.eq.s32.totalorder %s12, 0
      %p100 = por %p98, %p99
      %p101 = scmp.ne.s32.totalorder %s90, %s93
      %p102 = scmp.eq.s32.totalorder %s17, 1
      %p103 = por %p101, %p102
      %p104 = scmp.ne.s32.totalorder %s93, %s94
      %p105 = scmp.eq.s32.totalorder %s17, 0
      %p106 = por %p104, %p105
      %p107 = scmp.ne.s32.totalorder %s93, %s94
      %p108 = scmp.eq.s32.totalorder %s18, 1
      %p109 = por %p107, %p108
      %p111 = scmp.ne.s32.totalorder %s94, %s110
      %p112 = scmp.eq.s32.totalorder %s18, 0
      %p113 = por %p111, %p112
      %p114 = scmp.le.s32.totalorder 1, %s12
      %p115 = scmp.lt.s32.totalorder %s12, 3
      %p116 = pnand %p114, %p115
      %p117 = pneg %p116
      // Predicated region
      $region9: #{tpu_custom_call.1} parent=5 // pred_check
        _
      $region10: #{tpu_custom_call.1} parent=5 // pred_check_branch
        %119 = sbr.rel (%p116) target = $region12
      $region11: #{tpu_custom_call.1} parent=5 // pred_region
        %s120 = ssub.s32 %s12, 1
        // Predicated region
        $region13: #{tpu_custom_call.1} parent=11 // pred_check
          %p121 = pneg %p59
        $region14: #{tpu_custom_call.1} parent=11 // pred_check_branch
          %123 = sbr.rel (%p121) target = $region16
        $region15: #{tpu_custom_call.1} parent=11 // pred_region
          _
        $region16: #{tpu_custom_call.1} parent=11 // pred_fallthru
          _
        // Predicated region
        $region17: #{tpu_custom_call.1} parent=11 // pred_check
          %p124 = pneg %p80
        $region18: #{tpu_custom_call.1} parent=11 // pred_check_branch
          %126 = sbr.rel (%p124) target = $region20
        $region19: #{tpu_custom_call.1} parent=11 // pred_region
          _
        $region20: #{tpu_custom_call.1} parent=11 // pred_fallthru
          _
      $region12: #{tpu_custom_call.1} parent=5 // pred_fallthru
        _
      %p127 = scmp.lt.s32.totalorder %s12, 2
      // Predicated region
      $region21: #{tpu_custom_call.1} parent=5 // pred_check
        %p128 = pneg %p127
      $region22: #{tpu_custom_call.1} parent=5 // pred_check_branch
        %130 = sbr.rel (%p128) target = $region24
      $region23: #{tpu_custom_call.1} parent=5 // pred_region
        // Predicated region
        $region25: #{tpu_custom_call.1} parent=23 // pred_check
          %p131 = pneg %p32
        $region26: #{tpu_custom_call.1} parent=23 // pred_check_branch
          %133 = sbr.rel (%p131) target = $region28
        $region27: #{tpu_custom_call.1} parent=23 // pred_region
          %s134 = smul.u32 8, %s12
          %p135 = scmp.lt.s32.totalorder %s134, 15
          %s136 = scalar_select %p135, %s134, 15
          %s137 = smul.addr %s136, 8
          %s138 = scalar_lea.vmem %s0, %s137
          %s139 = smul.u32 8, %s12
        $region28: #{tpu_custom_call.1} parent=23 // pred_fallthru
          _
      $region24: #{tpu_custom_call.1} parent=5 // pred_fallthru
        _
      %p140 = scmp.le.s32.totalorder 1, %s12
      %p141 = scmp.lt.s32.totalorder %s12, 3
      %p142 = pnand %p140, %p141
      %p143 = pneg %p142
      // Predicated region
      $region29: #{tpu_custom_call.1} parent=5 // pred_check
        _
      $region30: #{tpu_custom_call.1} parent=5 // pred_check_branch
        %145 = sbr.rel (%p142) target = $region32
      $region31: #{tpu_custom_call.1} parent=5 // pred_region
        %s146 = ssub.s32 %s12, 1
        %s147 = smul.u32 8, %s17
        %p148 = scmp.lt.s32.totalorder %s147, 15
        %s149 = scalar_select %p148, %s147, 15
        %s150 = smul.addr %s149, 8
        %s151 = scalar_lea.vmem %s0, %s150
        %p152 = pneg %p38
        %p153 = pneg %p35
        %p154 = pneg %p59
        %p155 = pneg %p56
        %p156 = pneg %p80
        %p157 = pneg %p77
        %p158 = pneg %p106
        %p159 = pneg %p103
        %s160 = sand.u32 %s93, 1
        %s161 = scalar_lea.sflag [#allocation3], %s160
        %s162 = sand.u32 %s93, 1
        %s163 = smul.addr %s162, 64
        %s164 = scalar_lea.vmem [#allocation2], %s163
        %s165 = smul.u32 8, %s17
        %p166 = scmp.lt.s32.totalorder %s165, 15
        %s167 = scalar_select %p166, %s165, 15
        %s168 = smul.addr %s167, 8
        %s169 = scalar_lea.vmem %s0, %s168
        %s170 = smul.u32 8, %s17
        %s171 = smul.u32 8, %s17
        %v172 = vld [vmem:[%s169] sm:$0xff]
        %v173 = vld [vmem:[%s169 + $0x8] sm:$0xff]
        %v174 = vld [vmem:[%s169 + $0x10] sm:$0xff]
        %v175 = vld [vmem:[%s169 + $0x18] sm:$0xff]
        %v176 = vld [vmem:[%s169 + $0x20] sm:$0xff]
        %v177 = vld [vmem:[%s169 + $0x28] sm:$0xff]
        %v178 = vld [vmem:[%s169 + $0x30] sm:$0xff]
        %v179 = vld [vmem:[%s169 + $0x38] sm:$0xff]
        %v180 = vld [vmem:[%s1] sm:$0xff]
        %v181 = vld [vmem:[%s1 + $0x8] sm:$0xff]
        %v182 = vld [vmem:[%s1 + $0x10] sm:$0xff]
        %v183 = vld [vmem:[%s1 + $0x18] sm:$0xff]
        %v184 = vld [vmem:[%s1 + $0x20] sm:$0xf]
        %v185 = vld [vmem:[%s2] sm:$0x1]
        %v187 = vlaneseq
        %v188 = vshrl.u32 %v187, 7
        %v189 = vsub.s32 0, %v188
        %v190 = vrot.slane %v185, %v189
        %vm192 = vcmask 293888
        %v194 = vsel %vm192, %v172, 0
        %v197 = vsel %vm192, %v173, 0
        %v200 = vsel %vm192, %v174, 0
        %v203 = vsel %vm192, %v175, 0
        %v206 = vsel %vm192, %v176, 0
        %v209 = vsel %vm192, %v177, 0
        %v212 = vsel %vm192, %v178, 0
        %v215 = vsel %vm192, %v179, 0
        %vm217 = vcmask 1043456
        %v219 = vsel %vm217, %v184, 0
        %221 = vmatprep.subr.mxu0 0.0
        %222 = vmatpush1.msra.mxu0 0.0
        %223 = vmatprep.subr.mxu0 0.0
        %224 = vmatpush1.msra.mxu0 0.0
        %225 = vmatprep.subr.mxu0 0.0
        %226 = vmatpush1.msra.mxu0 0.0
        %227 = vmatprep.subr.mxu0 0.0
        %228 = vmatpush1.msra.mxu0 0.0
        %229 = vmatprep.subr.mxu0 0.0
        %230 = vmatpush1.msra.mxu0 0.0
        %231 = vmatprep.subr.mxu0 0.0
        %232 = vmatpush1.msra.mxu0 0.0
        %233 = vmatprep.subr.mxu0 0.0
        %234 = vmatpush1.msra.mxu0 0.0
        %235 = vmatprep.subr.mxu0 0.0
        %236 = vmatpush1.msra.mxu0 0.0
        %237 = vmatprep.subr.mxu0 0.0
        %238 = vmatpush1.msra.mxu0 0.0
        %239 = vmatprep.subr.mxu0 0.0
        %240 = vmatpush1.msra.mxu0 0.0
        %241 = vmatprep.subr.mxu0 0.0
        %242 = vmatpush1.msra.mxu0 0.0
        %243 = vmatprep.subr.mxu0 0.0
        %244 = vmatpush1.msra.mxu0 %v219
        %245 = vmatprep.subr.mxu0 0.0
        %246 = vmatpush1.msra.mxu0 %v183
        %247 = vmatprep.subr.mxu0 0.0
        %248 = vmatpush1.msra.mxu0 %v182
        %249 = vmatprep.subr.mxu0 0.0
        %250 = vmatpush1.msra.mxu0 %v181
        %251 = vmatprep.subr.mxu0 0.0
        %252 = vmatpush1.msra.mxu0 %v180
        %253 = vmatprep.subr.mxu0 0.0
        %254 = vmatpush2.msra.mxu0 0.0
        %255 = vmatprep.subr.mxu0 0.0
        %256 = vmatpush2.msra.mxu0 0.0
        %257 = vmatprep.subr.mxu0 0.0
        %258 = vmatpush2.msra.mxu0 0.0
        %259 = vmatprep.subr.mxu0 0.0
        %260 = vmatpush2.msra.mxu0 0.0
        %261 = vmatprep.subr.mxu0 0.0
        %262 = vmatpush2.msra.mxu0 0.0
        %263 = vmatprep.subr.mxu0 0.0
        %264 = vmatpush2.msra.mxu0 0.0
        %265 = vmatprep.subr.mxu0 0.0
        %266 = vmatpush2.msra.mxu0 0.0
        %267 = vmatprep.subr.mxu0 0.0
        %268 = vmatpush2.msra.mxu0 0.0
        %269 = vmatprep.subr.mxu0 0.0
        %270 = vmatpush2.msra.mxu0 0.0
        %271 = vmatprep.subr.mxu0 0.0
        %272 = vmatpush2.msra.mxu0 0.0
        %273 = vmatprep.subr.mxu0 0.0
        %274 = vmatpush2.msra.mxu0 0.0
        %275 = vmatprep.subr.mxu0 0.0
        %276 = vmatpush2.msra.mxu0 0.0
        %277 = vmatprep.subr.mxu0 0.0
        %278 = vmatpush2.msra.mxu0 0.0
        %279 = vmatprep.subr.mxu0 0.0
        %280 = vmatpush2.msra.mxu0 0.0
        %281 = vmatprep.subr.mxu0 0.0
        %282 = vmatpush2.msra.mxu0 0.0
        %283 = vmatprep.subr.mxu0 0.0
        %284 = vmatpush2.msra.mxu0 0.0
        %285 = vmatprep.mubr.f32.mxu0 0.0
        %286 = vmatmul.mubr.f32.gmra.mxu0 %v194
        %v287 = vpop.f32.mrf.mxu0
        %v288 = vadd.f32 %v190, %v287
        %v289 = vpop.f32.mrf.mxu0
        %290 = vmatprep.mubr.f32.mxu0 0.0
        %291 = vmatmul.mubr.f32.gmra.mxu0 %v197
        %v292 = vpop.f32.mrf.mxu0
        %v293 = vadd.f32 %v190, %v292
        %v294 = vpop.f32.mrf.mxu0
        %295 = vmatprep.mubr.f32.mxu0 0.0
        %296 = vmatmul.mubr.f32.gmra.mxu0 %v200
        %v297 = vpop.f32.mrf.mxu0
        %v298 = vadd.f32 %v190, %v297
        %v299 = vpop.f32.mrf.mxu0
        %300 = vmatprep.mubr.f32.mxu0 0.0
        %301 = vmatmul.mubr.f32.gmra.mxu0 %v203
        %v302 = vpop.f32.mrf.mxu0
        %v303 = vadd.f32 %v190, %v302
        %v304 = vpop.f32.mrf.mxu0
        %305 = vmatprep.mubr.f32.mxu0 0.0
        %306 = vmatmul.mubr.f32.gmra.mxu0 %v206
        %v307 = vpop.f32.mrf.mxu0
        %v308 = vadd.f32 %v190, %v307
        %v309 = vpop.f32.mrf.mxu0
        %310 = vmatprep.mubr.f32.mxu0 0.0
        %311 = vmatmul.mubr.f32.gmra.mxu0 %v209
        %v312 = vpop.f32.mrf.mxu0
        %v313 = vadd.f32 %v190, %v312
        %v314 = vpop.f32.mrf.mxu0
        %315 = vmatprep.mubr.f32.mxu0 0.0
        %316 = vmatmul.mubr.f32.gmra.mxu0 %v212
        %v317 = vpop.f32.mrf.mxu0
        %v318 = vadd.f32 %v190, %v317
        %v319 = vpop.f32.mrf.mxu0
        %320 = vmatprep.mubr.f32.mxu0 0.0
        %321 = vmatmul.mubr.f32.gmra.mxu0 %v215
        %v322 = vpop.f32.mrf.mxu0
        %v323 = vadd.f32 %v190, %v322
        %v324 = vpop.f32.mrf.mxu0
        %325 = vdwg.mxu0
        %vm326 = vcmp.gt.f32.partialorder %v288, 0.0
        %vm327 = vcmp.gt.f32.partialorder %v293, 0.0
        %vm328 = vcmp.gt.f32.partialorder %v298, 0.0
        %vm329 = vcmp.gt.f32.partialorder %v303, 0.0
        %vm330 = vcmp.gt.f32.partialorder %v308, 0.0
        %vm331 = vcmp.gt.f32.partialorder %v313, 0.0
        %vm332 = vcmp.gt.f32.partialorder %v318, 0.0
        %vm333 = vcmp.gt.f32.partialorder %v323, 0.0
        %v334 = vmul.f32 %v288, 0.2
        %v335 = vmul.f32 %v293, 0.2
        %v336 = vmul.f32 %v298, 0.2
        %v337 = vmul.f32 %v303, 0.2
        %v338 = vmul.f32 %v308, 0.2
        %v339 = vmul.f32 %v313, 0.2
        %v340 = vmul.f32 %v318, 0.2
        %v341 = vmul.f32 %v323, 0.2
        %v342 = vsel %vm326, %v288, %v334
        %v343 = vsel %vm327, %v293, %v335
        %v344 = vsel %vm328, %v298, %v336
        %v345 = vsel %vm329, %v303, %v337
        %v346 = vsel %vm330, %v308, %v338
        %v347 = vsel %vm331, %v313, %v339
        %v348 = vsel %vm332, %v318, %v340
        %v349 = vsel %vm333, %v323, %v341
        %350 = vst [vmem:[%s164] sm:$0xff] %v342
        %351 = vst [vmem:[%s164 + $0x8] sm:$0xff] %v343
        %352 = vst [vmem:[%s164 + $0x10] sm:$0xff] %v344
        %353 = vst [vmem:[%s164 + $0x18] sm:$0xff] %v345
        %354 = vst [vmem:[%s164 + $0x20] sm:$0xff] %v346
        %355 = vst [vmem:[%s164 + $0x28] sm:$0xff] %v347
        %356 = vst [vmem:[%s164 + $0x30] sm:$0xff] %v348
        %357 = vst [vmem:[%s164 + $0x38] sm:$0xff] %v349
        %s358 = sand.u32 %s93, 1
        %s359 = scalar_lea.sflag [#allocation3], %s358
        %s360 = sand.u32 %s93, 1
        %s361 = smul.addr %s360, 64
        %s362 = scalar_lea.vmem [#allocation2], %s361
        // Predicated region
        $region33: #{tpu_custom_call.1} parent=31 // pred_check
          %p363 = pneg %p103
        $region34: #{tpu_custom_call.1} parent=31 // pred_check_branch
          %365 = sbr.rel (%p363) target = $region36
        $region35: #{tpu_custom_call.1} parent=31 // pred_region
          %s366 = smul.u32 8, %s17
          %s368 = ssub.s32 1024, 1024
          %369 = vsyncadd %s359, %s368
          %s370 = smul.addr %s366, 128
          %s371 = scalar_lea.hbm %s3, %s370
          %s372 = sshll.u32 %s362, 4
          %s373 = int_to_ptr.vmem [resolvable:$true] %s372
          %378 = dma.vmem_to_hbm [thread:$0]  %s373, 1024, %s371, %s359, 128, 128, 8
        $region36: #{tpu_custom_call.1} parent=31 // pred_fallthru
          _
      $region32: #{tpu_custom_call.1} parent=5 // pred_fallthru
        _
      %p379 = scmp.le.s32.totalorder 2, %s12
      // Predicated region
      $region37: #{tpu_custom_call.1} parent=5 // pred_check
        %p380 = pneg %p379
      $region38: #{tpu_custom_call.1} parent=5 // pred_check_branch
        %382 = sbr.rel (%p380) target = $region40
      $region39: #{tpu_custom_call.1} parent=5 // pred_region
        %s383 = ssub.s32 %s12, 2
        // Predicated region
        $region41: #{tpu_custom_call.1} parent=39 // pred_check
          %p384 = pneg %p109
        $region42: #{tpu_custom_call.1} parent=39 // pred_check_branch
          %386 = sbr.rel (%p384) target = $region44
        $region43: #{tpu_custom_call.1} parent=39 // pred_region
          %s387 = sand.u32 %s94, 1
          %s388 = scalar_lea.sflag [#allocation3], %s387
          %s389 = sand.u32 %s94, 1
          %s390 = smul.addr %s389, 64
          %s391 = scalar_lea.vmem [#allocation2], %s390
          %392 = dma.done %s388, 1024
        $region44: #{tpu_custom_call.1} parent=39 // pred_fallthru
          _
      $region40: #{tpu_custom_call.1} parent=5 // pred_fallthru
        _
    $region6: #{tpu_custom_call.1} parent=1 // loop_footer
      %s16 = sadd.s32 1, %s12
    $region7: #{tpu_custom_call.1} parent=1 // loop_footer_branch
      %11 = sbr.rel target = $region3
    $region8: #{tpu_custom_call.1} parent=1 // loop_exit
      _
    %393 = vsyncpa [#allocation3], 1
    %s394 = scalar_lea.sflag [#allocation3], 1
    %395 = vsyncpa %s394, 1

</llo_original>
